<compile_context>
chip_gen: v7x
topology: tpu7x:2x2x1
jax: 0.10.0
libtpu: 0.0.40
codegen_flags: <defaults>
</compile_context>

<pallas_src>
import functools

import jax
import jax.numpy as jnp
from jax.experimental import pallas as pl
from jax.experimental.pallas import tpu as pltpu


# ---------------------------------------------------------------------------
# Kernel 1: deep path.  Running spatial max of the raw fc_deep matmul; the
# BN shift and ReLU are applied once at the end (valid: per-column constant
# shift + monotone ReLU commute with the max).
# ---------------------------------------------------------------------------
def _deep_kernel(y_ref, w_deep_ref, deep_shift_ref, attrs_ref, max_sc, *,
                 tsy, sy_valid, mask_tail):
    sy = pl.program_id(1)

    @pl.when(sy == 0)
    def _():
        max_sc[...] = jnp.full_like(max_sc, -jnp.inf)

    # bf16 operands (cast is a no-op if the caller streams bf16), f32 MXU acc.
    yd = jnp.dot(y_ref[0].astype(jnp.bfloat16), w_deep_ref[...],
                 preferred_element_type=jnp.float32)
    if mask_tail:
        # Mask padded rows to -inf so they cannot corrupt the per-batch max.
        rows = jax.lax.broadcasted_iota(jnp.int32, yd.shape, 0) + sy * tsy
        yd = jnp.where(rows < sy_valid, yd, -jnp.inf)
    max_sc[...] = jnp.maximum(max_sc[...], jnp.max(yd, axis=0, keepdims=True))

    @pl.when(sy == pl.num_programs(1) - 1)
    def _():
        attrs_ref[0] = jnp.maximum(max_sc[...] + deep_shift_ref[...], 0.0)


# ---------------------------------------------------------------------------
# Kernel 2: shallow path, tiled over Sx.
# fc_skip (conv+BN) -> AdIN(gamma, beta from attrs) -> ReLU -> fc_cls -> ReLU
# ---------------------------------------------------------------------------
def _main_kernel(x_ref, attrs_ref, w_skip_ref, skip_shift_ref,
                 w_cls_ref, cls_shift_ref, out_ref):
    C = x_ref.shape[-1]
    attrs = attrs_ref[0]                       # (1, 2C) f32
    gamma = attrs[:, :C]                       # (1, C)
    beta = attrs[:, C:]                        # (1, C)

    x = x_ref[0].astype(jnp.bfloat16)          # no-op if caller streams bf16
    xs = jnp.dot(x, w_skip_ref[...],
                 preferred_element_type=jnp.float32) + skip_shift_ref[...]
    xa = jnp.maximum(xs * (gamma + 1.0) + beta, 0.0)

    o = jnp.dot(xa.astype(w_cls_ref.dtype), w_cls_ref[...],
                preferred_element_type=jnp.float32) + cls_shift_ref[...]
    out_ref[0] = jnp.maximum(o, 0.0).astype(out_ref.dtype)   # bf16 writeback


# ---------------------------------------------------------------------------
# Wrapper helpers
# ---------------------------------------------------------------------------
def _round_up(n, m):
    return ((n + m - 1) // m) * m


def _choose_tile(s, target, align=16):
    """Tile size (multiple of 16 for bf16 sublane packing) <= target; the
    spatial extent is padded up to a multiple of the tile by the wrapper, so
    there is never an oversized single full-extent block."""
    target = max(align, (target // align) * align)
    if s <= target:
        return _round_up(s, align)
    return target


def _vmem_limit_bytes():
    # Raise the default scoped-VMEM limit while leaving ~25% headroom under
    # physical VMEM (matters on v7x: 64 MiB physical -> ~48 MiB limit).
    try:
        cap = int(pltpu.get_tpu_info().vmem_capacity_bytes)
    except Exception:
        cap = 64 << 20
    return int(min(cap * 3 // 4, 96 << 20))


def _cap_sx_tile(tsx, C, x_bytes, out_bytes, vmem_limit):
    """Cap the pass-2 Sx tile so double-buffered x + double-buffered out +
    f32 intermediates + weights stay comfortably under the VMEM limit."""
    per_row = 2 * C * (x_bytes + out_bytes + 4)          # x, out (2x buf), xs/xa
    weight_bytes = 2 * 2 * (C * C * 2)                   # bf16 w_skip + w_cls, 2x buf
    budget = max(int(vmem_limit * 0.6) - weight_bytes, per_row * 16)
    max_rows = max(16, (budget // per_row) // 16 * 16)
    return max(16, min(tsx, max_rows))


def gci_forward_nhwc(x, y, params, *, sx_tile=4096, sy_tile=2048):
    """Channels-last core.  x: (B, Sx, C), y: (B, Sy, C) -> (B, Sx, C) bf16.

    Inputs may be f32 (cast to bf16 in VMEM inside the kernels) or bf16
    (streamed as-is, half the HBM read traffic)."""
    B, Sx, C = x.shape
    _, Sy, _ = y.shape

    cdt = jnp.bfloat16
    out_dtype = jnp.bfloat16
    # Fold the eval-mode BN scale into the conv weights (conv-BN folding),
    # keep only the per-channel shift for the kernels.
    w_deep = (params["w_deep"] * params["deep_scale"][None, :]).astype(cdt)
    w_skip = (params["w_skip"] * params["skip_scale"][None, :]).astype(cdt)
    w_cls = (params["w_cls"] * params["cls_scale"][None, :]).astype(cdt)
    deep_shift = params["deep_shift"].reshape(1, 2 * C).astype(jnp.float32)
    skip_shift = params["skip_shift"].reshape(1, C).astype(jnp.float32)
    cls_shift = params["cls_shift"].reshape(1, C).astype(jnp.float32)

    vmem_limit = _vmem_limit_bytes()
    tsy = _choose_tile(Sy, sy_tile)
    tsx = _choose_tile(
        Sx, _cap_sx_tile(sx_tile, C, jnp.dtype(x.dtype).itemsize,
                         jnp.dtype(out_dtype).itemsize, vmem_limit))

    # Pad spatial dims to tile multiples (pass-1 tail rows are masked in the
    # kernel; pass-2 tail rows are sliced off the output).
    Sy_pad = _round_up(Sy, tsy)
    Sx_pad = _round_up(Sx, tsx)
    if Sy_pad != Sy:
        y = jnp.pad(y, ((0, 0), (0, Sy_pad - Sy), (0, 0)))
    if Sx_pad != Sx:
        x = jnp.pad(x, ((0, 0), (0, Sx_pad - Sx), (0, 0)))

    # ---- pass 1: per-batch global attributes (gamma | beta), shape (B,1,2C) --
    deep = functools.partial(_deep_kernel, tsy=tsy, sy_valid=Sy,
                             mask_tail=(Sy_pad != Sy))
    attrs = pl.pallas_call(
        deep,
        out_shape=jax.ShapeDtypeStruct((B, 1, 2 * C), jnp.float32),
        grid=(B, Sy_pad // tsy),
        in_specs=[
            pl.BlockSpec((1, tsy, C), lambda b, s: (b, s, 0)),      # y tile
            pl.BlockSpec((C, 2 * C), lambda b, s: (0, 0)),          # w_deep
            pl.BlockSpec((1, 2 * C), lambda b, s: (0, 0)),          # deep_shift
        ],
        out_specs=pl.BlockSpec((1, 1, 2 * C), lambda b, s: (b, 0, 0)),
        scratch_shapes=[pltpu.VMEM((1, 2 * C), jnp.float32)],
        compiler_params=pltpu.CompilerParams(
            dimension_semantics=("parallel", "arbitrary"),
            vmem_limit_bytes=vmem_limit),
    )(y, w_deep, deep_shift)

    # ---- pass 2: stream x tiles through fc_skip -> AdIN -> fc_cls -----------
    out = pl.pallas_call(
        _main_kernel,
        out_shape=jax.ShapeDtypeStruct((B, Sx_pad, C), out_dtype),
        grid=(B, Sx_pad // tsx),
        in_specs=[
            pl.BlockSpec((1, tsx, C), lambda b, s: (b, s, 0)),      # x tile
            pl.BlockSpec((1, 1, 2 * C), lambda b, s: (b, 0, 0)),    # attrs
            pl.BlockSpec((C, C), lambda b, s: (0, 0)),              # w_skip
            pl.BlockSpec((1, C), lambda b, s: (0, 0)),              # skip_shift
            pl.BlockSpec((C, C), lambda b, s: (0, 0)),              # w_cls
            pl.BlockSpec((1, C), lambda b, s: (0, 0)),              # cls_shift
        ],
        out_specs=pl.BlockSpec((1, tsx, C), lambda b, s: (b, s, 0)),
        compiler_params=pltpu.CompilerParams(
            dimension_semantics=("parallel", "parallel"),
            vmem_limit_bytes=vmem_limit),
    )(x, attrs, w_skip, skip_shift, w_cls, cls_shift)

    if Sx_pad != Sx:
        out = out[:, :Sx, :]
    return out


def gci_forward(x_nchw, y_nchw, params, *, sx_tile=4096, sy_tile=2048):
    """NCHW-compatible wrapper (matches the PyTorch module's interface).

    Casts to bf16 BEFORE the layout transposes and keeps bf16 through the
    final transpose, so the full-HBM transpose passes move half the bytes.
    Channels-last callers should use gci_forward_nhwc directly instead."""
    B, C, Hx, Wx = x_nchw.shape
    _, _, Hy, Wy = y_nchw.shape
    x = jnp.transpose(x_nchw.astype(jnp.bfloat16), (0, 2, 3, 1)).reshape(B, Hx * Wx, C)
    y = jnp.transpose(y_nchw.astype(jnp.bfloat16), (0, 2, 3, 1)).reshape(B, Hy * Wy, C)
    out = gci_forward_nhwc(x, y, params, sx_tile=sx_tile, sy_tile=sy_tile)
    return jnp.transpose(out.reshape(B, Hx, Wx, C), (0, 3, 1, 2))   # bf16 NCHW


# ---------------------------------------------------------------------------
# Parameter init + pure-JAX reference
# ---------------------------------------------------------------------------
def init_params(key, C):
    """Deterministic init mirroring GCI._init_params (eval-mode BN)."""
    eps = 1e-5
    k1, k2, k3 = jax.random.split(key, 3)

    def kaiming(k, cout, cin):
        # kaiming_normal_ for a 1x1 conv: std = sqrt(2 / fan_in), fan_in = cin
        return jax.random.normal(k, (cout, cin), jnp.float32) * jnp.sqrt(2.0 / cin)

    # conv weights stored transposed (C_in, C_out) for right-multiplication
    w_deep = kaiming(k1, 2 * C, C).T
    w_skip = kaiming(k2, C, C).T
    w_cls = kaiming(k3, C, C).T

    def bn_fold(n):
        mean = jnp.zeros((n,), jnp.float32)
        var = jnp.ones((n,), jnp.float32)
        gamma = jnp.ones((n,), jnp.float32)
        beta = jnp.zeros((n,), jnp.float32)
        scale = gamma / jnp.sqrt(var + eps)
        shift = beta - mean * scale
        return scale, shift

    ds, dsh = bn_fold(2 * C)   # fc_deep BN
    ss, ssh = bn_fold(C)       # fc_skip BN (affine=False -> gamma=1, beta=0)
    cs, csh = bn_fold(C)       # fc_cls BN

    return dict(w_deep=w_deep, deep_scale=ds, deep_shift=dsh,
                w_skip=w_skip, skip_scale=ss, skip_shift=ssh,
                w_cls=w_cls, cls_scale=cs, cls_shift=csh)


def gci_reference(x_nchw, y_nchw, p, compute_dtype=jnp.float32):
    """Pure-JAX reference (eval-mode BN), NCHW in / f32 NCHW out.

    compute_dtype=jnp.bfloat16 mirrors the kernel's mixed precision (operands
    rounded to bf16, accumulation in f32) for a tight correctness check."""
    B, C, Hx, Wx = x_nchw.shape
    _, _, Hy, Wy = y_nchw.shape
    x = jnp.transpose(x_nchw, (0, 2, 3, 1)).reshape(B, Hx * Wx, C)
    y = jnp.transpose(y_nchw, (0, 2, 3, 1)).reshape(B, Hy * Wy, C)

    q = lambda a: a.astype(compute_dtype).astype(jnp.float32)
    w_deep = q(p["w_deep"] * p["deep_scale"][None, :])
    w_skip = q(p["w_skip"] * p["skip_scale"][None, :])
    w_cls = q(p["w_cls"] * p["cls_scale"][None, :])
    x, y = q(x), q(y)

    yd = jnp.maximum(y @ w_deep + p["deep_shift"], 0.0)
    attrs = jnp.max(yd, axis=1)                      # (B, 2C)
    gamma, beta = attrs[:, :C], attrs[:, C:]

    xs = x @ w_skip + p["skip_shift"]
    xa = jnp.maximum(xs * (gamma[:, None, :] + 1.0) + beta[:, None, :], 0.0)
    xa = q(xa)
    o = jnp.maximum(xa @ w_cls + p["cls_shift"], 0.0)
    return jnp.transpose(o.reshape(B, Hx, Wx, C), (0, 3, 1, 2))


if __name__ == "__main__":
    key = jax.random.PRNGKey(0)
    kx, ky, kp = jax.random.split(key, 3)

    B, C = 2, 128            # inplanes = 128 (small synthetic version of 256)
    Hx = Wx = 16             # shallow feature map  -> Sx = 256
    Hy = Wy = 8              # deep feature map     -> Sy = 64

    x = jax.random.normal(kx, (B, C, Hx, Wx), jnp.float32)
    y = jax.random.normal(ky, (B, C, Hy, Wy), jnp.float32)
    params = init_params(kp, C)

    # Small tiles to exercise the Sx / Sy grid axes even at toy sizes.
    out = gci_forward(x, y, params, sx_tile=128, sy_tile=32)
    out = jax.block_until_ready(out)
    assert out.shape == (B, C, Hx, Wx)
    assert out.dtype == jnp.bfloat16
    out_f32 = out.astype(jnp.float32)

    # Tight check against a reference that mirrors the kernel's bf16 rounding
    # (kernel additionally rounds the final output to bf16).
    ref_mixed = gci_reference(x, y, params, compute_dtype=jnp.bfloat16)
    assert bool(jnp.allclose(out_f32, ref_mixed, rtol=3e-2, atol=3e-2))

    # Loose sanity check against the full-f32 reference.
    ref_f32 = gci_reference(x, y, params)
    assert bool(jnp.allclose(out_f32, ref_f32, rtol=5e-2, atol=3e-1))

    # Awkward (non-divisible) spatial sizes exercise padding + tail masking.
    Hx2 = Wx2 = 9            # Sx = 81
    Hy2 = Wy2 = 7            # Sy = 49
    x2 = jax.random.normal(kx, (B, C, Hx2, Wx2), jnp.float32)
    y2 = jax.random.normal(ky, (B, C, Hy2, Wy2), jnp.float32)
    out2 = jax.block_until_ready(
        gci_forward(x2, y2, params, sx_tile=48, sy_tile=32))
    assert out2.shape == (B, C, Hx2, Wx2)
    ref2 = gci_reference(x2, y2, params, compute_dtype=jnp.bfloat16)
    assert bool(jnp.allclose(out2.astype(jnp.float32), ref2, rtol=3e-2, atol=3e-2))

    print("KERNEL_OK")
</pallas_src>

<mosaic_0001>
module attributes {stable_mosaic.version = 11 : i64} {
  func.func @_deep_kernel(%arg0: i32, %arg1: i32, %arg2: memref<1x32x128xbf16, #tpu.memory_space<vmem>>, %arg3: memref<128x256xbf16, #tpu.memory_space<vmem>>, %arg4: memref<1x256xf32, #tpu.memory_space<vmem>>, %arg5: memref<1x1x256xf32, #tpu.memory_space<vmem>>, %arg6: memref<1x256xf32, #tpu.memory_space<vmem>>) attributes {dimension_semantics = [#tpu.dimension_semantics<parallel>, #tpu.dimension_semantics<arbitrary>], iteration_bounds = array<i64: 2, 2>, scalar_prefetch = 0 : i64, scratch_operands = 1 : i64, tpu.core_type = #tpu.core_type<tc>, window_params = [{transform_indices = @transform_0, window_bounds = array<i64: 1, 32, 128>}, {pipeline_mode = #tpu.pipeline_mode<synchronous>, transform_indices = @transform_1, window_bounds = array<i64: 128, 256>}, {pipeline_mode = #tpu.pipeline_mode<synchronous>, transform_indices = @transform_2, window_bounds = array<i64: 1, 256>}, {transform_indices = @transform_3, window_bounds = array<i64: 1, 1, 256>}]} {
    %c0_i32 = arith.constant 0 : i32
    %0 = arith.cmpi eq, %arg1, %c0_i32 : i32
    %1 = arith.extui %0 : i1 to i32
    %c0_i32_0 = arith.constant 0 : i32
    %2 = arith.cmpi ne, %1, %c0_i32_0 : i32
    scf.if %2 {
      %cst_11 = arith.constant 0xFF800000 : f32
      %15 = vector.broadcast %cst_11 : f32 to vector<1x256xf32>
      %c0_12 = arith.constant 0 : index
      %c0_13 = arith.constant 0 : index
      %16 = vector.load %arg6[%c0_12, %c0_13] : memref<1x256xf32, #tpu.memory_space<vmem>>, vector<1x256xf32>
      tpu.vector_store %arg6[%c0_12, %c0_13], %15 {strides = array<i32>} : memref<1x256xf32, #tpu.memory_space<vmem>>, vector<1x256xf32>,
    } else {
    }
    %c0 = arith.constant 0 : index
    %c0_1 = arith.constant 0 : index
    %c0_2 = arith.constant 0 : index
    %3 = vector.load %arg2[%c0, %c0_1, %c0_2] : memref<1x32x128xbf16, #tpu.memory_space<vmem>>, vector<1x32x128xbf16>
    %4 = vector.shape_cast %3 : vector<1x32x128xbf16> to vector<32x128xbf16>
    %c0_3 = arith.constant 0 : index
    %c0_4 = arith.constant 0 : index
    %5 = vector.load %arg3[%c0_3, %c0_4] : memref<128x256xbf16, #tpu.memory_space<vmem>>, vector<128x256xbf16>
    %cst = arith.constant dense<0.000000e+00> : vector<32x256xf32>
    %6 = tpu.matmul %4, %5, %cst {dimension_numbers = #tpu.dot_dimension_numbers<[1], [0], [0], [1], [0, 0, 1, 1], [], []>} : vector<32x128xbf16>, vector<128x256xbf16>, vector<32x256xf32> -> vector<32x256xf32>
    %c0_5 = arith.constant 0 : index
    %c0_6 = arith.constant 0 : index
    %7 = vector.load %arg6[%c0_5, %c0_6] : memref<1x256xf32, #tpu.memory_space<vmem>>, vector<1x256xf32>
    %cst_7 = arith.constant dense<0xFF800000> : vector<256xf32>
    %8 = vector.multi_reduction <maximumf>, %6, %cst_7 [0] : vector<32x256xf32> to vector<256xf32>
    %9 = vector.shape_cast %8 : vector<256xf32> to vector<1x256xf32>
    %10 = arith.maximumf %7, %9 : vector<1x256xf32>
    %c0_8 = arith.constant 0 : index
    %c0_9 = arith.constant 0 : index
    %11 = vector.load %arg6[%c0_8, %c0_9] : memref<1x256xf32, #tpu.memory_space<vmem>>, vector<1x256xf32>
    tpu.vector_store %arg6[%c0_8, %c0_9], %10 {strides = array<i32>} : memref<1x256xf32, #tpu.memory_space<vmem>>, vector<1x256xf32>,
    %c1_i32 = arith.constant 1 : i32
    %12 = arith.cmpi eq, %arg1, %c1_i32 : i32
    %13 = arith.extui %12 : i1 to i32
    %c0_i32_10 = arith.constant 0 : i32
    %14 = arith.cmpi ne, %13, %c0_i32_10 : i32
    scf.if %14 {
      %c0_11 = arith.constant 0 : index
      %c0_12 = arith.constant 0 : index
      %15 = vector.load %arg6[%c0_11, %c0_12] : memref<1x256xf32, #tpu.memory_space<vmem>>, vector<1x256xf32>
      %c0_13 = arith.constant 0 : index
      %c0_14 = arith.constant 0 : index
      %16 = vector.load %arg4[%c0_13, %c0_14] : memref<1x256xf32, #tpu.memory_space<vmem>>, vector<1x256xf32>
      %17 = arith.addf %15, %16 : vector<1x256xf32>
      %cst_15 = arith.constant 0.000000e+00 : f32
      %18 = vector.broadcast %cst_15 : f32 to vector<1x256xf32>
      %19 = arith.maximumf %17, %18 : vector<1x256xf32>
      %c0_16 = arith.constant 0 : index
      %c0_17 = arith.constant 0 : index
      %c0_18 = arith.constant 0 : index
      %20 = vector.load %arg5[%c0_16, %c0_17, %c0_18] : memref<1x1x256xf32, #tpu.memory_space<vmem>>, vector<1x1x256xf32>
      %21 = vector.shape_cast %20 : vector<1x1x256xf32> to vector<1x256xf32>
      %22 = vector.shape_cast %19 : vector<1x256xf32> to vector<1x1x256xf32>
      tpu.vector_store %arg5[%c0_16, %c0_17, %c0_18], %22 {strides = array<i32>} : memref<1x1x256xf32, #tpu.memory_space<vmem>>, vector<1x1x256xf32>,
    } else {
    }
    return
  }
  func.func @transform_0(%arg0: i32, %arg1: i32) -> (i32, i32, i32) {
    %c0_i32 = arith.constant 0 : i32
    %c0_i32_0 = arith.constant 0 : i32
    return %arg0, %arg1, %c0_i32 : i32, i32, i32
  }
  func.func @transform_1(%arg0: i32, %arg1: i32) -> (i32, i32) {
    %c0_i32 = arith.constant 0 : i32
    %c0_i32_0 = arith.constant 0 : i32
    %c0_i32_1 = arith.constant 0 : i32
    return %c0_i32, %c0_i32_0 : i32, i32
  }
  func.func @transform_2(%arg0: i32, %arg1: i32) -> (i32, i32) {
    %c0_i32 = arith.constant 0 : i32
    %c0_i32_0 = arith.constant 0 : i32
    %c0_i32_1 = arith.constant 0 : i32
    return %c0_i32, %c0_i32_0 : i32, i32
  }
  func.func @transform_3(%arg0: i32, %arg1: i32) -> (i32, i32, i32) {
    %c0_i32 = arith.constant 0 : i32
    %c0_i32_0 = arith.constant 0 : i32
    %c0_i32_1 = arith.constant 0 : i32
    return %arg0, %c0_i32, %c0_i32_0 : i32, i32, i32
  }
}

</mosaic_0001>

<llo_original>
// kernel: tpu_custom_call.1
$region0: #{tpu_custom_call.1}
  #allocation0 [shape = 'u32[]', space=smem, size = 0x4, offset = 0x4, fixed_abs, tag = 'smem constant byte address 0x4 - core index']
  #allocation1 [shape = 'u32[144,128]{1,0:T(1,128)}', space=vmem, size = 0x12000, scoped, tag = 'internal scratch']
  #allocation2 [shape = 'f32[1,256]{1,0:T(1,128)}', space=vmem, size = 0x400, scoped, tag = 'scratch operand']
  %s0 = inlined_call_operand.hbm [shape: bf16[2,64,128], index: 0, kind: input, shape index: {}]
  %s1 = inlined_call_operand.hbm [shape: bf16[128,256], index: 1, kind: input, shape index: {}]
  %s2 = inlined_call_operand.vmem [shape: f32[1,256], index: 2, kind: input, shape index: {}]
  %s3 = inlined_call_operand.hbm [shape: f32[2,1,256], index: 3, kind: output, shape index: {}]
  %s4 = sld [smem:[#allocation0]]
  $region61: #{tpu_custom_call.1} parent=0
    _
  %s6 = ssub.s32 1, %s4
  %s7 = scalar_select 0, %s6, %s4
  $region1: #{tpu_custom_call.1} parent=0
    #allocation3 [shape = 'u8[16384]{0}', space=vmem, size = 0x4000, scoped, tag = 'input window, operand 0']
    #allocation4 [shape = 's32[2]{0}', space=sflag, size = 0x8, scoped, tag = 'scoped memory for tpu_custom_call.1']
    #allocation5 [shape = 's32[2]{0}', space=sflag, size = 0x8, scoped, tag = 'scoped memory for tpu_custom_call.1']
    #allocation6 [shape = 'u8[65536]{0}', space=vmem, size = 0x10000, scoped, tag = 'input window, operand 1, single buffered']
    #allocation7 [shape = 's32[1]{0}', space=sflag, size = 0x4, scoped, tag = 'scoped memory for tpu_custom_call.1']
    #allocation8 [shape = 'u8[2048]{0}', space=vmem, size = 0x800, scoped, tag = 'output window, operand 0']
    %8 = vsyncpa [#allocation4], 0
    %s9 = scalar_lea.sflag [#allocation4], 1
    %10 = vsyncpa %s9, 0
    %11 = vsyncpa [#allocation7], 0
    %12 = vsyncpa [#allocation5], 0
    %s13 = scalar_lea.sflag [#allocation5], 1
    %14 = vsyncpa %s13, 0
    loop: start=0, step=1, limit=6
    $region2: #{tpu_custom_call.1} parent=1 // loop_pre_header
      _
    $region3: #{tpu_custom_call.1} parent=1 // loop_header
      %s16 = sphi 0, %s20
      %p17 = scmp.ge.s32.totalorder %s16, 6
      %s23 = sphi 0, %s35
      %s24 = sphi 0, %s31
      %s25 = sphi 0, %s23
      %s26 = sphi 0, %s24
      %s27 = sphi 0, %s25
      %s28 = sphi 0, %s26
      %s40 = sphi 0, %s42
      %s43 = sphi 0, %s40
      %s44 = sphi 0, %s43
      %s60 = sphi 0, %s44
      %s64 = sphi 0, %s64
      %s66 = sphi 0, %s64
      %s67 = sphi 0, %s66
      %s81 = sphi 0, %s67
      %s85 = sphi 0, %s85
      %s87 = sphi 0, %s85
      %s88 = sphi 0, %s87
      %s102 = sphi 0, %s88
      %s108 = sphi 0, %s110
      %s111 = sphi 0, %s108
      %s112 = sphi 0, %s111
      %s128 = sphi 0, %s112
    $region4: #{tpu_custom_call.1} parent=1 // loop_header_branch
      %19 = sbr.rel (%p17) target = $region8
    $region5: #{tpu_custom_call.1} parent=1 // loop_body
      %s21 = ssub.s32 %s16, 1
      %s22 = ssub.s32 %s16, 2
      %s29 = sadd.s32 1, %s24
      %p30 = scmp.ge.s32.totalorder %s29, 2
      %s31 = scalar_select %p30, 0, %s29
      %s32 = sadd.s32 1, %s23
      %s33 = scalar_select %p30, %s32, %s23
      %p34 = scmp.ge.s32.totalorder %s33, 2
      %s35 = scalar_select %p34, 0, %s33
      %s36 = ssub.s32 %s23, %s35
      %s37 = ssub.s32 %s24, %s31
      %s38 = sor.u32 %s36, %s37
      %p39 = scmp.eq.s32.totalorder %s38, 0
      %s41 = sadd.s32 %s40, 1
      %s42 = scalar_select %p39, %s40, %s41
      %p45 = pneg %p39
      %p46 = scmp.eq.s32.totalorder %s16, 3
      %p47 = por %p45, %p46
      %p48 = scmp.ne.s32.totalorder %s40, %s43
      %p49 = scmp.eq.s32.totalorder %s16, 0
      %p50 = por %p48, %p49
      %p51 = scmp.ne.s32.totalorder %s40, %s43
      %p52 = scmp.eq.s32.totalorder %s21, 3
      %p53 = por %p51, %p52
      %p54 = scmp.ne.s32.totalorder %s43, %s44
      %p55 = scmp.eq.s32.totalorder %s21, 0
      %p56 = por %p54, %p55
      %p57 = scmp.ne.s32.totalorder %s43, %s44
      %p58 = scmp.eq.s32.totalorder %s22, 3
      %p59 = por %p57, %p58
      %p61 = scmp.ne.s32.totalorder %s44, %s60
      %p62 = scmp.eq.s32.totalorder %s22, 0
      %p63 = por %p61, %p62
      %s65 = sadd.s32 %s64, 1
      %p68 = scmp.eq.s32.totalorder %s16, 3
      %p69 = scmp.ne.s32.totalorder %s64, %s66
      %p70 = scmp.eq.s32.totalorder %s16, 0
      %p71 = por %p69, %p70
      %p72 = scmp.ne.s32.totalorder %s64, %s66
      %p73 = scmp.eq.s32.totalorder %s21, 3
      %p74 = por %p72, %p73
      %p75 = scmp.ne.s32.totalorder %s66, %s67
      %p76 = scmp.eq.s32.totalorder %s21, 0
      %p77 = por %p75, %p76
      %p78 = scmp.ne.s32.totalorder %s66, %s67
      %p79 = scmp.eq.s32.totalorder %s22, 3
      %p80 = por %p78, %p79
      %p82 = scmp.ne.s32.totalorder %s67, %s81
      %p83 = scmp.eq.s32.totalorder %s22, 0
      %p84 = por %p82, %p83
      %s86 = sadd.s32 %s85, 1
      %p89 = scmp.eq.s32.totalorder %s16, 3
      %p90 = scmp.ne.s32.totalorder %s85, %s87
      %p91 = scmp.eq.s32.totalorder %s16, 0
      %p92 = por %p90, %p91
      %p93 = scmp.ne.s32.totalorder %s85, %s87
      %p94 = scmp.eq.s32.totalorder %s21, 3
      %p95 = por %p93, %p94
      %p96 = scmp.ne.s32.totalorder %s87, %s88
      %p97 = scmp.eq.s32.totalorder %s21, 0
      %p98 = por %p96, %p97
      %p99 = scmp.ne.s32.totalorder %s87, %s88
      %p100 = scmp.eq.s32.totalorder %s22, 3
      %p101 = por %p99, %p100
      %p103 = scmp.ne.s32.totalorder %s88, %s102
      %p104 = scmp.eq.s32.totalorder %s22, 0
      %p105 = por %p103, %p104
      %s106 = ssub.s32 %s23, %s35
      %p107 = scmp.eq.s32.totalorder %s106, 0
      %s109 = sadd.s32 %s108, 1
      %s110 = scalar_select %p107, %s108, %s109
      %p113 = pneg %p107
      %p114 = scmp.eq.s32.totalorder %s16, 3
      %p115 = por %p113, %p114
      %p116 = scmp.ne.s32.totalorder %s108, %s111
      %p117 = scmp.eq.s32.totalorder %s16, 0
      %p118 = por %p116, %p117
      %p119 = scmp.ne.s32.totalorder %s108, %s111
      %p120 = scmp.eq.s32.totalorder %s21, 3
      %p121 = por %p119, %p120
      %p122 = scmp.ne.s32.totalorder %s111, %s112
      %p123 = scmp.eq.s32.totalorder %s21, 0
      %p124 = por %p122, %p123
      %p125 = scmp.ne.s32.totalorder %s111, %s112
      %p126 = scmp.eq.s32.totalorder %s22, 3
      %p127 = por %p125, %p126
      %p129 = scmp.ne.s32.totalorder %s112, %s128
      %p130 = scmp.eq.s32.totalorder %s22, 0
      %p131 = por %p129, %p130
      %p132 = scmp.le.s32.totalorder 1, %s16
      %p133 = scmp.lt.s32.totalorder %s16, 5
      %p134 = pnand %p132, %p133
      %p135 = pneg %p134
      // Predicated region
      $region9: #{tpu_custom_call.1} parent=5 // pred_check
        _
      $region10: #{tpu_custom_call.1} parent=5 // pred_check_branch
        %137 = sbr.rel (%p134) target = $region12
      $region11: #{tpu_custom_call.1} parent=5 // pred_region
        %s138 = ssub.s32 %s16, 1
        // Predicated region
        $region13: #{tpu_custom_call.1} parent=11 // pred_check
          %p139 = pneg %p77
        $region14: #{tpu_custom_call.1} parent=11 // pred_check_branch
          %141 = sbr.rel (%p139) target = $region16
        $region15: #{tpu_custom_call.1} parent=11 // pred_region
          %s143 = ssub.s32 2048, 2048
          %144 = vsyncadd [#allocation7], %s143
          %s145 = sshll.u32 [#allocation6], 4
          %s146 = int_to_ptr.vmem [resolvable:$true] %s145
          %151 = dma.hbm_to_vmem [thread:$0]  %s1, 2048, %s146, [#allocation7], 128, 128, 8
        $region16: #{tpu_custom_call.1} parent=11 // pred_fallthru
          _
        // Predicated region
        $region17: #{tpu_custom_call.1} parent=11 // pred_check
          %p152 = pneg %p98
        $region18: #{tpu_custom_call.1} parent=11 // pred_check_branch
          %154 = sbr.rel (%p152) target = $region20
        $region19: #{tpu_custom_call.1} parent=11 // pred_region
          _
        $region20: #{tpu_custom_call.1} parent=11 // pred_fallthru
          _
      $region12: #{tpu_custom_call.1} parent=5 // pred_fallthru
        _
      %p155 = scmp.lt.s32.totalorder %s16, 4
      // Predicated region
      $region21: #{tpu_custom_call.1} parent=5 // pred_check
        %p156 = pneg %p155
      $region22: #{tpu_custom_call.1} parent=5 // pred_check_branch
        %158 = sbr.rel (%p156) target = $region24
      $region23: #{tpu_custom_call.1} parent=5 // pred_region
        // Predicated region
        $region25: #{tpu_custom_call.1} parent=23 // pred_check
          %p159 = pneg %p50
        $region26: #{tpu_custom_call.1} parent=23 // pred_check_branch
          %161 = sbr.rel (%p159) target = $region28
        $region27: #{tpu_custom_call.1} parent=23 // pred_region
          %s162 = sand.u32 %s40, 1
          %s163 = scalar_lea.sflag [#allocation4], %s162
          %s164 = sand.u32 %s40, 1
          %s165 = smul.addr %s164, 16
          %s166 = scalar_lea.vmem [#allocation3], %s165
          %s167 = smul.u32 4, %s24
          %s169 = ssub.s32 256, 256
          %170 = vsyncadd %s163, %s169
          %s171 = smul.addr %s23, 8
          %s172 = sadd.s32 %s167, %s171
          %s173 = smul.addr %s172, 64
          %s174 = scalar_lea.hbm %s0, %s173
          %s175 = sshll.u32 %s166, 4
          %s176 = int_to_ptr.vmem [resolvable:$true] %s175
          %181 = dma.hbm_to_vmem [thread:$0]  %s174, 256, %s176, %s163, 64, 64, 4
        $region28: #{tpu_custom_call.1} parent=23 // pred_fallthru
          _
      $region24: #{tpu_custom_call.1} parent=5 // pred_fallthru
        _
      %p182 = scmp.le.s32.totalorder 1, %s16
      %p183 = scmp.lt.s32.totalorder %s16, 5
      %p184 = pnand %p182, %p183
      %p185 = pneg %p184
      // Predicated region
      $region29: #{tpu_custom_call.1} parent=5 // pred_check
        _
      $region30: #{tpu_custom_call.1} parent=5 // pred_check_branch
        %187 = sbr.rel (%p184) target = $region32
      $region31: #{tpu_custom_call.1} parent=5 // pred_region
        %s188 = ssub.s32 %s16, 1
        %s189 = sand.u32 %s43, 1
        %s190 = scalar_lea.sflag [#allocation4], %s189
        %s191 = sand.u32 %s43, 1
        %s192 = smul.addr %s191, 16
        %s193 = scalar_lea.vmem [#allocation3], %s192
        // Predicated region
        $region33: #{tpu_custom_call.1} parent=31 // pred_check
          %p194 = pneg %p56
        $region34: #{tpu_custom_call.1} parent=31 // pred_check_branch
          %196 = sbr.rel (%p194) target = $region36
        $region35: #{tpu_custom_call.1} parent=31 // pred_region
          %197 = dma.done %s190, 256
        $region36: #{tpu_custom_call.1} parent=31 // pred_fallthru
          _
        // Predicated region
        $region37: #{tpu_custom_call.1} parent=31 // pred_check
          %p198 = pneg %p77
        $region38: #{tpu_custom_call.1} parent=31 // pred_check_branch
          %200 = sbr.rel (%p198) target = $region40
        $region39: #{tpu_custom_call.1} parent=31 // pred_region
          %201 = dma.done [#allocation7], 2048
        $region40: #{tpu_custom_call.1} parent=31 // pred_fallthru
          _
        %s202 = sand.u32 %s43, 1
        %s203 = scalar_lea.sflag [#allocation4], %s202
        %s204 = sand.u32 %s43, 1
        %s205 = smul.addr %s204, 16
        %s206 = scalar_lea.vmem [#allocation3], %s205
        %p207 = pneg %p56
        %p208 = pneg %p53
        %p209 = pneg %p77
        %p210 = pneg %p74
        %p211 = pneg %p98
        %p212 = pneg %p95
        %p213 = pneg %p124
        %p214 = pneg %p121
        %s215 = sand.u32 %s111, 1
        %s216 = scalar_lea.sflag [#allocation5], %s215
        %s217 = sand.u32 %s111, 1
        %s218 = smul.addr %s217, 2
        %s219 = scalar_lea.vmem [#allocation8], %s218
        %s220 = smul.u32 4, %s26
        %p222 = scmp.eq.s32.totalorder %s26, 0
        // Predicated region
        $region41: #{tpu_custom_call.1} parent=31 // pred_check
          %p223 = pneg %p222
        $region42: #{tpu_custom_call.1} parent=31 // pred_check_branch
          %225 = sbr.rel (%p223) target = $region44
        $region43: #{tpu_custom_call.1} parent=31 // pred_region
          %v226 = vlaneseq
          %vm227 = vcmp.ge.s32.totalorder %v226, 0
          %vm228 = vcmp.lt.s32.totalorder %v226, 256
          %vm229 = vmand %vm227, %vm228
          %230 = vst.msk [vmem:[#allocation2] sm:$0x3] %vm229, -inf
        $region44: #{tpu_custom_call.1} parent=31 // pred_fallthru
          _
        %v231 = vld [vmem:[%s193] sm:$0xf]
        %v232 = vld [vmem:[%s193 + $0x4] sm:$0xf]
        %v233 = vld [vmem:[%s193 + $0x8] sm:$0xf]
        %v234 = vld [vmem:[%s193 + $0xc] sm:$0xf]
        %v235 = vld [vmem:[#allocation6] sm:$0xff]
        %v236 = vld [vmem:[#allocation6 + $0x8] sm:$0xff]
        %v237 = vld [vmem:[#allocation6 + $0x10] sm:$0xff]
        %v238 = vld [vmem:[#allocation6 + $0x18] sm:$0xff]
        %v239 = vld [vmem:[#allocation6 + $0x20] sm:$0xff]
        %v240 = vld [vmem:[#allocation6 + $0x28] sm:$0xff]
        %v241 = vld [vmem:[#allocation6 + $0x30] sm:$0xff]
        %v242 = vld [vmem:[#allocation6 + $0x38] sm:$0xff]
        %v243 = vld [vmem:[#allocation6 + $0x40] sm:$0xff]
        %v244 = vld [vmem:[#allocation6 + $0x48] sm:$0xff]
        %v245 = vld [vmem:[#allocation6 + $0x50] sm:$0xff]
        %v246 = vld [vmem:[#allocation6 + $0x58] sm:$0xff]
        %v247 = vld [vmem:[#allocation6 + $0x60] sm:$0xff]
        %v248 = vld [vmem:[#allocation6 + $0x68] sm:$0xff]
        %v249 = vld [vmem:[#allocation6 + $0x70] sm:$0xff]
        %v250 = vld [vmem:[#allocation6 + $0x78] sm:$0xff]
        %v255 = vunpack.c.l.b16 %v231
        %v256 = vunpack.c.l.b16 %v232
        %v257 = vunpack.c.l.b16 %v233
        %v258 = vunpack.c.l.b16 %v234
        %v259 = vpack.c.b16 %v256, %v255
        %v260 = vpack.c.b16 %v258, %v257
        %v279 = vunpack.c.l.b16 %v235
        %v280 = vunpack.c.h.b16 %v235
        %v281 = vunpack.c.l.b16 %v236
        %v282 = vunpack.c.h.b16 %v236
        %v283 = vunpack.c.l.b16 %v237
        %v284 = vunpack.c.h.b16 %v237
        %v285 = vunpack.c.l.b16 %v238
        %v286 = vunpack.c.h.b16 %v238
        %v287 = vunpack.c.l.b16 %v239
        %v288 = vunpack.c.h.b16 %v239
        %v289 = vunpack.c.l.b16 %v240
        %v290 = vunpack.c.h.b16 %v240
        %v291 = vunpack.c.l.b16 %v241
        %v292 = vunpack.c.h.b16 %v241
        %v293 = vunpack.c.l.b16 %v242
        %v294 = vunpack.c.h.b16 %v242
        %v295 = vunpack.c.l.b16 %v243
        %v296 = vunpack.c.h.b16 %v243
        %v297 = vunpack.c.l.b16 %v244
        %v298 = vunpack.c.h.b16 %v244
        %v299 = vunpack.c.l.b16 %v245
        %v300 = vunpack.c.h.b16 %v245
        %v301 = vunpack.c.l.b16 %v246
        %v302 = vunpack.c.h.b16 %v246
        %v303 = vunpack.c.l.b16 %v247
        %v304 = vunpack.c.h.b16 %v247
        %v305 = vunpack.c.l.b16 %v248
        %v306 = vunpack.c.h.b16 %v248
        %v307 = vunpack.c.l.b16 %v249
        %v308 = vunpack.c.h.b16 %v249
        %v309 = vunpack.c.l.b16 %v250
        %v310 = vunpack.c.h.b16 %v250
        %v311 = vpack.c.b16 %v281, %v279
        %v312 = vpack.c.b16 %v282, %v280
        %v313 = vpack.c.b16 %v285, %v283
        %v314 = vpack.c.b16 %v286, %v284
        %v315 = vpack.c.b16 %v289, %v287
        %v316 = vpack.c.b16 %v290, %v288
        %v317 = vpack.c.b16 %v293, %v291
        %v318 = vpack.c.b16 %v294, %v292
        %v319 = vpack.c.b16 %v297, %v295
        %v320 = vpack.c.b16 %v298, %v296
        %v321 = vpack.c.b16 %v301, %v299
        %v322 = vpack.c.b16 %v302, %v300
        %v323 = vpack.c.b16 %v305, %v303
        %v324 = vpack.c.b16 %v306, %v304
        %v325 = vpack.c.b16 %v309, %v307
        %v326 = vpack.c.b16 %v310, %v308
        %343 = vmatprep.subr.bf16.mxu0 %v312
        %344 = vmatpush1.bf16.msra.mxu0 %v311
        %345 = vmatprep.subr.bf16.mxu0 %v314
        %346 = vmatpush1.bf16.msra.mxu0 %v313
        %347 = vmatprep.subr.bf16.mxu0 %v316
        %348 = vmatpush1.bf16.msra.mxu0 %v315
        %349 = vmatprep.subr.bf16.mxu0 %v318
        %350 = vmatpush1.bf16.msra.mxu0 %v317
        %351 = vmatprep.subr.bf16.mxu0 %v320
        %352 = vmatpush1.bf16.msra.mxu0 %v319
        %353 = vmatprep.subr.bf16.mxu0 %v322
        %354 = vmatpush1.bf16.msra.mxu0 %v321
        %355 = vmatprep.subr.bf16.mxu0 %v324
        %356 = vmatpush1.bf16.msra.mxu0 %v323
        %357 = vmatprep.subr.bf16.mxu0 %v326
        %358 = vmatpush1.bf16.msra.mxu0 %v325
        %359 = vmatprep.subr.bf16.mxu0 0
        %360 = vmatpush1.bf16.msra.mxu0 0
        %361 = vmatprep.subr.bf16.mxu0 0
        %362 = vmatpush1.bf16.msra.mxu0 0
        %363 = vmatprep.subr.bf16.mxu0 0
        %364 = vmatpush1.bf16.msra.mxu0 0
        %365 = vmatprep.subr.bf16.mxu0 0
        %366 = vmatpush1.bf16.msra.mxu0 0
        %367 = vmatprep.subr.bf16.mxu0 0
        %368 = vmatpush1.bf16.msra.mxu0 0
        %369 = vmatprep.subr.bf16.mxu0 0
        %370 = vmatpush1.bf16.msra.mxu0 0
        %371 = vmatprep.subr.bf16.mxu0 0
        %372 = vmatpush1.bf16.msra.mxu0 0
        %373 = vmatprep.subr.bf16.mxu0 0
        %374 = vmatpush1.bf16.msra.mxu0 0
        %375 = vmatprep.mubr.bf16.mxu0 0
        %376 = vmatmul.mubr.bf16.gmra.mrb[0].mxu0 %v259
        %v377 = vpop.f32.mrb[0].mxu0
        %v378 = vadd.f32 0.0, %v377
        %v379 = vpop.f32.mrb[0].mxu0
        %v380 = vadd.f32 0.0, %v379
        %v381 = vpop.f32.mrb[0].mxu0
        %v382 = vadd.f32 0.0, %v381
        %v383 = vpop.f32.mrb[0].mxu0
        %v384 = vadd.f32 0.0, %v383
        %385 = vmatprep.mubr.bf16.mxu0 0
        %386 = vmatmul.mubr.bf16.gmra.mrb[0].mxu0 %v260
        %v387 = vpop.f32.mrb[0].mxu0
        %v388 = vadd.f32 0.0, %v387
        %v389 = vpop.f32.mrb[0].mxu0
        %v390 = vadd.f32 0.0, %v389
        %v391 = vpop.f32.mrb[0].mxu0
        %v392 = vadd.f32 0.0, %v391
        %v393 = vpop.f32.mrb[0].mxu0
        %v394 = vadd.f32 0.0, %v393
        %395 = vdwg.mxu0
        %v396 = vld [vmem:[#allocation2] sm:$0x3]
        %v397 = vmax.f32 %v378, %v388
        %v398 = vmax.f32 %v382, %v392
        %v399 = vmax.f32 %v397, %v398
        %v400 = vrot.slane %v399, 4
        %v401 = vmax.f32 %v399, %v400
        %v402 = vrot.slane %v401, 2
        %v403 = vmax.f32 %v401, %v402
        %v404 = vrot.slane %v403, 1
        %v405 = vmax.f32 %v403, %v404
        %v406 = vmax.f32 %v380, %v390
        %v407 = vmax.f32 %v384, %v394
        %v408 = vmax.f32 %v406, %v407
        %v409 = vrot.slane %v408, 4
        %v410 = vmax.f32 %v408, %v409
        %v411 = vrot.slane %v410, 2
        %v412 = vmax.f32 %v410, %v411
        %v413 = vrot.slane %v412, 1
        %v414 = vmax.f32 %v412, %v413
        %v417 = vcombine.low %v405, %v414
        %v419 = vunpack.c.l.s4 1966171168
        %v420 = vunpack.c.0.s8 %v419
        %v421 = vlaneseq
        %v422 = vshrl.u32 %v421, 7
        %v423 = vsub.s32 %v420, %v422
        %v424 = vrot.slane %v417, %v423
        %v426 = vunpack.c.l.s4 1966171168
        %v427 = vunpack.c.0.s8 %v426
        %v428 = vlaneseq
        %v429 = vshrl.u32 %v428, 7
        %v430 = vsub.s32 %v427, %v429
        %v431 = vrot.slane %v424, %v430
        %v433 = vmax.f32 %v396, %v431
        %v434 = vlaneseq
        %vm435 = vcmp.ge.s32.totalorder %v434, 0
        %vm436 = vcmp.lt.s32.totalorder %v434, 256
        %vm437 = vmand %vm435, %vm436
        %438 = vst.msk [vmem:[#allocation2] sm:$0x3] %vm437, %v433
        %p439 = scmp.eq.s32.totalorder %s26, 1
        // Predicated region
        $region45: #{tpu_custom_call.1} parent=31 // pred_check
          %p440 = pneg %p439
        $region46: #{tpu_custom_call.1} parent=31 // pred_check_branch
          %442 = sbr.rel (%p440) target = $region48
        $region47: #{tpu_custom_call.1} parent=31 // pred_region
          %v443 = vld [vmem:[#allocation2] sm:$0x3]
          %v444 = vld [vmem:[%s2] sm:$0x3]
          %v445 = vadd.f32 %v443, %v444
          %v446 = vmax.f32 %v445, 0.0
          %447 = vst.msk [vmem:[%s219] sm:$0x3] %vm437, %v446
        $region48: #{tpu_custom_call.1} parent=31 // pred_fallthru
          _
        %s448 = sand.u32 %s111, 1
        %s449 = scalar_lea.sflag [#allocation5], %s448
        %s450 = sand.u32 %s111, 1
        %s451 = smul.addr %s450, 2
        %s452 = scalar_lea.vmem [#allocation8], %s451
        // Predicated region
        $region49: #{tpu_custom_call.1} parent=31 // pred_check
          %p453 = pneg %p121
        $region50: #{tpu_custom_call.1} parent=31 // pred_check_branch
          %455 = sbr.rel (%p453) target = $region52
        $region51: #{tpu_custom_call.1} parent=31 // pred_region
          %s457 = ssub.s32 32, 32
          %458 = vsyncadd %s449, %s457
          %s459 = smul.addr %s25, 2
          %s460 = smul.addr %s459, 16
          %s461 = scalar_lea.hbm %s3, %s460
          %s463 = sshll.u32 %s452, 4
          %s464 = int_to_ptr.vmem [resolvable:$true] %s463
          %466 = dma.vmem_to_hbm [thread:$0]  %s464, 32, %s461, %s449
        $region52: #{tpu_custom_call.1} parent=31 // pred_fallthru
          _
      $region32: #{tpu_custom_call.1} parent=5 // pred_fallthru
        _
      %p467 = scmp.le.s32.totalorder 2, %s16
      // Predicated region
      $region53: #{tpu_custom_call.1} parent=5 // pred_check
        %p468 = pneg %p467
      $region54: #{tpu_custom_call.1} parent=5 // pred_check_branch
        %470 = sbr.rel (%p468) target = $region56
      $region55: #{tpu_custom_call.1} parent=5 // pred_region
        %s471 = ssub.s32 %s16, 2
        // Predicated region
        $region57: #{tpu_custom_call.1} parent=55 // pred_check
          %p472 = pneg %p127
        $region58: #{tpu_custom_call.1} parent=55 // pred_check_branch
          %474 = sbr.rel (%p472) target = $region60
        $region59: #{tpu_custom_call.1} parent=55 // pred_region
          %s475 = sand.u32 %s112, 1
          %s476 = scalar_lea.sflag [#allocation5], %s475
          %s477 = sand.u32 %s112, 1
          %s478 = smul.addr %s477, 2
          %s479 = scalar_lea.vmem [#allocation8], %s478
          %480 = dma.done %s476, 32
        $region60: #{tpu_custom_call.1} parent=55 // pred_fallthru
          _
      $region56: #{tpu_custom_call.1} parent=5 // pred_fallthru
        _
    $region6: #{tpu_custom_call.1} parent=1 // loop_footer
      %s20 = sadd.s32 1, %s16
    $region7: #{tpu_custom_call.1} parent=1 // loop_footer_branch
      %15 = sbr.rel target = $region3
    $region8: #{tpu_custom_call.1} parent=1 // loop_exit
      _
    %481 = vsyncpa [#allocation4], 1
    %s482 = scalar_lea.sflag [#allocation4], 1
    %483 = vsyncpa %s482, 1
    %484 = vsyncpa [#allocation7], 1
    %485 = vsyncpa [#allocation5], 1
    %s486 = scalar_lea.sflag [#allocation5], 1
    %487 = vsyncpa %s486, 1

</llo_original>
